<compile_context>
chip_gen: v5e
topology: v5e:2x2
jax: 0.10.0
libtpu: 0.0.40
codegen_flags: <defaults>
</compile_context>

<pallas_src>
import jax
import jax.numpy as jnp
from jax.experimental import pallas as pl
from jax.experimental.pallas import tpu as pltpu

EPS = 1e-5
_TARGET_PAYLOAD_BYTES = 4 << 20   # ~1-4 MiB per grid step hits the HBM roofline
_VMEM_LIMIT_BYTES = 48 << 20      # below v7x's 64 MiB physical VMEM; fine on v5e/v6e


def _pick_tiles(N, Cin, Cout, HWp):
    """Byte-budgeted blocking.

    Returns (Nb, thw): block Nb images x thw pixels per grid step so that the
    pass-2 payload (Cin+Cout)*Nb*thw*4 bytes is ~multi-MiB, while keeping at
    least 2 grid steps so both v7x TensorCores get work.  thw is always a
    multiple of 128 (HWp is pre-padded), so stores stay lane-dense.
    """
    bytes_per_pixel = (Cin + Cout) * 4
    target_pixels = max(128, _TARGET_PAYLOAD_BYTES // bytes_per_pixel)

    # thw: largest multiple-of-128 divisor of HWp within the pixel budget.
    thw = 128
    for cand in range(128, HWp + 1, 128):
        if HWp % cand == 0 and cand <= target_pixels:
            thw = cand

    # Nb: amortize over the batch when a whole image is still under budget
    # (the small-HW case; this is where tiny-DMA overhead dominates).
    Nb = 1
    if thw == HWp:
        budget_imgs = max(1, target_pixels // HWp)
        for cand in range(min(N, budget_imgs), 0, -1):
            if N % cand == 0:
                Nb = cand
                break

    # Keep >= 2 grid steps when the problem allows it (megacore sharding).
    def steps():
        return (N // Nb) * (HWp // thw)

    while steps() < 2 and Nb > 1:
        Nb = max(d for d in range(1, Nb) if N % d == 0)
    if steps() < 2 and HWp % 256 == 0:
        start = (HWp // 2) // 128 * 128
        for cand in range(start, 127, -128):
            if HWp % cand == 0:
                thw = cand
                break
    return Nb, thw


# --------------------- pass 1: batch statistics of x ------------------------


def _stats_kernel(x_ref, psum_ref, pxxt_ref):
    # x_ref block: (Nb, Cin, thw).  Outputs are per-group partial accumulators
    # (block index depends only on the "parallel" group axis; constant along
    # the "arbitrary" pixel axis -> resident accumulator).
    @pl.when(pl.program_id(1) == 0)
    def _():
        psum_ref[...] = jnp.zeros_like(psum_ref)
        pxxt_ref[...] = jnp.zeros_like(pxxt_ref)

    nb, cin, thw = x_ref.shape
    ones_col = jnp.ones((thw, 1), jnp.float32)   # hoisted out of the loop

    def body(n, carry):
        s, xx = carry
        xt = x_ref[n]                                            # (Cin, thw)
        # channel sums via the MXU (keeps the XLU slot free)
        s = s + jnp.dot(xt, ones_col, preferred_element_type=jnp.float32)
        # x @ x^T contracting the pixel (lane) axis -> (Cin, Cin)
        xx = xx + jax.lax.dot_general(
            xt, xt, (((1,), (1,)), ((), ())),
            preferred_element_type=jnp.float32)
        return s, xx

    s0 = jnp.zeros((cin, 1), jnp.float32)
    xx0 = jnp.zeros((cin, cin), jnp.float32)
    s, xx = jax.lax.fori_loop(0, nb, body, (s0, xx0), unroll=(nb <= 8))
    psum_ref[0] += s
    pxxt_ref[0] += xx


def _batch_stats(x3, Nb, thw):
    """x3: (N, Cin, HWp) f32 -> (psum (G,Cin,1), pxxt (G,Cin,Cin)); G=N//Nb."""
    N, Cin, HWp = x3.shape
    G = N // Nb
    return pl.pallas_call(
        _stats_kernel,
        grid=(G, HWp // thw),
        in_specs=[pl.BlockSpec((Nb, Cin, thw), lambda g, t: (g, 0, t))],
        out_specs=(pl.BlockSpec((1, Cin, 1), lambda g, t: (g, 0, 0)),
                   pl.BlockSpec((1, Cin, Cin), lambda g, t: (g, 0, 0))),
        out_shape=(jax.ShapeDtypeStruct((G, Cin, 1), jnp.float32),
                   jax.ShapeDtypeStruct((G, Cin, Cin), jnp.float32)),
        compiler_params=pltpu.CompilerParams(
            # group axis shards across TensorCores; pixel axis accumulates
            dimension_semantics=("parallel", "arbitrary"),
            vmem_limit_bytes=_VMEM_LIMIT_BYTES),
    )(x3)


# --------------------- pass 2: apply the collapsed affine map ---------------


def _apply_kernel(x_ref, wf_ref, bf_ref, o_ref):
    w = wf_ref[...]                                              # (Cout, Cin)
    b = bf_ref[...]                                              # (Cout, 1)
    nb = x_ref.shape[0]

    def body(n, carry):
        # (Cout, Cin) @ (Cin, thw): tiny-K matmul; kernel is HBM-bound anyway.
        y = jnp.dot(w, x_ref[n], preferred_element_type=jnp.float32)
        o_ref[n] = (y + b).astype(o_ref.dtype)                   # lane-dense
        return carry

    jax.lax.fori_loop(0, nb, body, 0, unroll=(nb <= 8))


def _apply(x3, w_final, b_final, Nb, thw):
    N, Cin, HWp = x3.shape
    Cout = w_final.shape[0]
    return pl.pallas_call(
        _apply_kernel,
        grid=(N // Nb, HWp // thw),
        in_specs=[
            pl.BlockSpec((Nb, Cin, thw), lambda g, t: (g, 0, t)),
            pl.BlockSpec((Cout, Cin), lambda g, t: (0, 0)),   # fetched once
            pl.BlockSpec((Cout, 1), lambda g, t: (0, 0)),     # fetched once
        ],
        out_specs=pl.BlockSpec((Nb, Cout, thw), lambda g, t: (g, 0, t)),
        out_shape=jax.ShapeDtypeStruct((N, Cout, HWp), jnp.float32),
        compiler_params=pltpu.CompilerParams(
            # fully independent tiles -> shard across both TensorCores
            dimension_semantics=("parallel", "parallel"),
            vmem_limit_bytes=_VMEM_LIMIT_BYTES),
    )(x3, w_final, b_final)


# --------------------- full forward ------------------------------------------


def convp_forward(x, w1, b1, g1, be1, w2, b2, g2, be2):
    """x: (N, Cin, H, W) f32 NCHW.
    w1: (Ch, Cin), b1: (Ch,)          -- Conv2d(Cin, Ch=10*Cout, k=1)
    g1, be1: (Ch,)                    -- BatchNorm2d(Ch) affine
    w2: (Cout, Ch), b2: (Cout,)       -- Conv2d(Ch, Cout, k=1)
    g2, be2: (Cout,)                  -- BatchNorm2d(Cout) affine
    Returns (N, Cout, H, W) f32.
    """
    N, Cin, H, W = x.shape
    Cout = w2.shape[0]
    HW = H * W
    P = N * HW                                      # true pixel count

    x3 = x.reshape(N, Cin, HW).astype(jnp.float32)  # free view, NCHW-native
    # Pad the lane axis to a multiple of 128 (zeros contribute nothing to the
    # sums and the padded output pixels are discarded below) -> unmasked vst.
    HWp = HW if HW % 128 == 0 else ((HW + 127) // 128) * 128
    if HWp != HW:
        x3 = jnp.pad(x3, ((0, 0), (0, 0), (0, HWp - HW)))

    Nb, thw = _pick_tiles(N, Cin, Cout, HWp)

    # ---- pass 1: per-channel batch statistics of x (Pallas) ----
    psum, pxxt = _batch_stats(x3, Nb, thw)
    sum_x = jnp.sum(psum, axis=0)                    # (Cin, 1)
    xxt = jnp.sum(pxxt, axis=0)                      # (Cin, Cin)
    mean_x = sum_x / P                               # (Cin, 1)
    cov = xxt / P - mean_x @ mean_x.T                # (Cin, Cin), biased

    # ---- fold conv1+BN1+conv2+BN2 into one per-pixel affine map (tiny) ----
    # b1, b2, be1 cancel exactly: training-mode BN subtracts the batch mean,
    # which removes every constant per-channel shift.  Clamp the quadratic
    # forms at 0 to guard against f32 cancellation before rsqrt.
    var1 = jnp.maximum(jnp.sum((w1 @ cov) * w1, axis=1), 0.0)   # (Ch,)
    a1 = g1 * jax.lax.rsqrt(var1 + EPS)                         # (Ch,)
    w_b = w2 @ (a1[:, None] * w1)                               # (Cout, Cin)
    var2 = jnp.maximum(jnp.sum((w_b @ cov) * w_b, axis=1), 0.0)  # (Cout,)
    a2 = g2 * jax.lax.rsqrt(var2 + EPS)                         # (Cout,)
    w_final = a2[:, None] * w_b                                 # (Cout, Cin)
    b_final = be2[:, None] - w_final @ mean_x                   # (Cout, 1)

    # ---- pass 2: lane-dense tiled apply (Pallas) ----
    out3 = _apply(x3, w_final, b_final, Nb, thw)
    return out3[:, :, :HW].reshape(N, Cout, H, W)


def convp_reference(x, w1, b1, g1, be1, w2, b2, g2, be2):
    """Straightforward plain-JAX reference with PyTorch training-mode BN."""
    N, Cin, H, W = x.shape
    xf = jnp.transpose(x, (0, 2, 3, 1)).reshape(-1, Cin)   # (P, Cin)
    h = xf @ w1.T + b1
    mu = h.mean(0)
    var = ((h - mu) ** 2).mean(0)
    h = (h - mu) * jax.lax.rsqrt(var + EPS) * g1 + be1
    y = h @ w2.T + b2
    mu = y.mean(0)
    var = ((y - mu) ** 2).mean(0)
    y = (y - mu) * jax.lax.rsqrt(var + EPS) * g2 + be2
    return jnp.transpose(y.reshape(N, H, W, -1), (0, 3, 1, 2))


if __name__ == "__main__":
    # Small deterministic setup: N=2, Cin=4, H=W=16, out_channels=8 -> hidden=80
    N, Cin, H, W = 2, 4, 16, 16
    Cout = 8
    Ch = 10 * Cout

    key = jax.random.PRNGKey(0)
    kx, kw1, kb1, kw2, kb2, kg1, kbe1, kg2, kbe2 = jax.random.split(key, 9)

    x = jax.random.normal(kx, (N, Cin, H, W), dtype=jnp.float32)

    # PyTorch-layout weights: Conv2d weight (out, in, 1, 1) squeezed.
    w1 = jax.random.normal(kw1, (Ch, Cin), dtype=jnp.float32) * (1.0 / Cin) ** 0.5
    b1 = jax.random.normal(kb1, (Ch,), dtype=jnp.float32) * 0.1
    w2 = jax.random.normal(kw2, (Cout, Ch), dtype=jnp.float32) * (1.0 / Ch) ** 0.5
    b2 = jax.random.normal(kb2, (Cout,), dtype=jnp.float32) * 0.1
    g1 = 1.0 + 0.1 * jax.random.normal(kg1, (Ch,), dtype=jnp.float32)
    be1 = 0.1 * jax.random.normal(kbe1, (Ch,), dtype=jnp.float32)
    g2 = 1.0 + 0.1 * jax.random.normal(kg2, (Cout,), dtype=jnp.float32)
    be2 = 0.1 * jax.random.normal(kbe2, (Cout,), dtype=jnp.float32)

    fwd = jax.jit(convp_forward)
    out = fwd(x, w1, b1, g1, be1, w2, b2, g2, be2)
    out = jax.block_until_ready(out)

    ref = convp_reference(x, w1, b1, g1, be1, w2, b2, g2, be2)
    assert out.shape == (N, Cout, H, W), out.shape
    assert jnp.allclose(out, ref, atol=1e-3, rtol=1e-3), (
        "mismatch vs reference, max abs err = "
        + str(float(jnp.max(jnp.abs(out - ref)))))

    print("KERNEL_OK")
</pallas_src>

<mosaic_0001>
module attributes {stable_mosaic.version = 11 : i64} {
  func.func @_stats_kernel(%arg0: i32, %arg1: i32, %arg2: memref<1x4x256xf32, #tpu.memory_space<vmem>>, %arg3: memref<1x4x1xf32, #tpu.memory_space<vmem>>, %arg4: memref<1x4x4xf32, #tpu.memory_space<vmem>>) attributes {dimension_semantics = [#tpu.dimension_semantics<parallel>, #tpu.dimension_semantics<arbitrary>], iteration_bounds = array<i64: 2, 1>, scalar_prefetch = 0 : i64, scratch_operands = 0 : i64, tpu.core_type = #tpu.core_type<tc>, window_params = [{transform_indices = @transform_0, window_bounds = array<i64: 1, 4, 256>}, {transform_indices = @transform_1, window_bounds = array<i64: 1, 4, 1>}, {transform_indices = @transform_2, window_bounds = array<i64: 1, 4, 4>}]} {
    %c0_i32 = arith.constant 0 : i32
    %0 = arith.cmpi eq, %arg1, %c0_i32 : i32
    %1 = arith.extui %0 : i1 to i32
    %c0_i32_0 = arith.constant 0 : i32
    %2 = arith.cmpi ne, %1, %c0_i32_0 : i32
    scf.if %2 {
      %cst_19 = arith.constant 0.000000e+00 : f32
      %25 = vector.broadcast %cst_19 : f32 to vector<1x4x1xf32>
      %c0_20 = arith.constant 0 : index
      %c0_21 = arith.constant 0 : index
      %c0_22 = arith.constant 0 : index
      %26 = vector.load %arg3[%c0_20, %c0_21, %c0_22] : memref<1x4x1xf32, #tpu.memory_space<vmem>>, vector<1x4x1xf32>
      tpu.vector_store %arg3[%c0_20, %c0_21, %c0_22], %25 {strides = array<i32>} : memref<1x4x1xf32, #tpu.memory_space<vmem>>, vector<1x4x1xf32>,
      %cst_23 = arith.constant 0.000000e+00 : f32
      %27 = vector.broadcast %cst_23 : f32 to vector<1x4x4xf32>
      %c0_24 = arith.constant 0 : index
      %c0_25 = arith.constant 0 : index
      %c0_26 = arith.constant 0 : index
      %28 = vector.load %arg4[%c0_24, %c0_25, %c0_26] : memref<1x4x4xf32, #tpu.memory_space<vmem>>, vector<1x4x4xf32>
      tpu.vector_store %arg4[%c0_24, %c0_25, %c0_26], %27 {strides = array<i32>} : memref<1x4x4xf32, #tpu.memory_space<vmem>>, vector<1x4x4xf32>,
    } else {
    }
    %cst = arith.constant 1.000000e+00 : f32
    %3 = vector.broadcast %cst : f32 to vector<256x1xf32>
    %cst_1 = arith.constant 0.000000e+00 : f32
    %4 = vector.broadcast %cst_1 : f32 to vector<4x1xf32>
    %cst_2 = arith.constant 0.000000e+00 : f32
    %5 = vector.broadcast %cst_2 : f32 to vector<4x4xf32>
    %c0_i32_3 = arith.constant 0 : i32
    %6 = arith.index_cast %c0_i32_3 : i32 to index
    %c0 = arith.constant 0 : index
    %c0_4 = arith.constant 0 : index
    %7 = vector.load %arg2[%6, %c0, %c0_4] : memref<1x4x256xf32, #tpu.memory_space<vmem>>, vector<1x4x256xf32>
    %8 = vector.shape_cast %7 : vector<1x4x256xf32> to vector<4x256xf32>
    %cst_5 = arith.constant dense<0.000000e+00> : vector<4x1xf32>
    %9 = tpu.matmul %8, %3, %cst_5 {dimension_numbers = #tpu.dot_dimension_numbers<[1], [0], [0], [1], [0, 0, 1, 1], [], []>} : vector<4x256xf32>, vector<256x1xf32>, vector<4x1xf32> -> vector<4x1xf32>
    %10 = arith.addf %4, %9 : vector<4x1xf32>
    %cst_6 = arith.constant dense<0.000000e+00> : vector<4x4xf32>
    %11 = tpu.matmul %8, %8, %cst_6 {dimension_numbers = #tpu.dot_dimension_numbers<[1], [1], [0], [0], [0, 0, 1, 0], [], []>} : vector<4x256xf32>, vector<4x256xf32>, vector<4x4xf32> -> vector<4x4xf32>
    %12 = arith.addf %5, %11 : vector<4x4xf32>
    %c1_i32 = arith.constant 1 : i32
    %c0_7 = arith.constant 0 : index
    %c0_8 = arith.constant 0 : index
    %c0_9 = arith.constant 0 : index
    %13 = vector.load %arg3[%c0_7, %c0_8, %c0_9] : memref<1x4x1xf32, #tpu.memory_space<vmem>>, vector<1x4x1xf32>
    %14 = vector.shape_cast %13 : vector<1x4x1xf32> to vector<4x1xf32>
    %15 = arith.addf %14, %10 : vector<4x1xf32>
    %c0_10 = arith.constant 0 : index
    %c0_11 = arith.constant 0 : index
    %c0_12 = arith.constant 0 : index
    %16 = vector.load %arg3[%c0_10, %c0_11, %c0_12] : memref<1x4x1xf32, #tpu.memory_space<vmem>>, vector<1x4x1xf32>
    %17 = vector.shape_cast %16 : vector<1x4x1xf32> to vector<4x1xf32>
    %18 = vector.shape_cast %15 : vector<4x1xf32> to vector<1x4x1xf32>
    tpu.vector_store %arg3[%c0_10, %c0_11, %c0_12], %18 {strides = array<i32>} : memref<1x4x1xf32, #tpu.memory_space<vmem>>, vector<1x4x1xf32>,
    %c0_13 = arith.constant 0 : index
    %c0_14 = arith.constant 0 : index
    %c0_15 = arith.constant 0 : index
    %19 = vector.load %arg4[%c0_13, %c0_14, %c0_15] : memref<1x4x4xf32, #tpu.memory_space<vmem>>, vector<1x4x4xf32>
    %20 = vector.shape_cast %19 : vector<1x4x4xf32> to vector<4x4xf32>
    %21 = arith.addf %20, %12 : vector<4x4xf32>
    %c0_16 = arith.constant 0 : index
    %c0_17 = arith.constant 0 : index
    %c0_18 = arith.constant 0 : index
    %22 = vector.load %arg4[%c0_16, %c0_17, %c0_18] : memref<1x4x4xf32, #tpu.memory_space<vmem>>, vector<1x4x4xf32>
    %23 = vector.shape_cast %22 : vector<1x4x4xf32> to vector<4x4xf32>
    %24 = vector.shape_cast %21 : vector<4x4xf32> to vector<1x4x4xf32>
    tpu.vector_store %arg4[%c0_16, %c0_17, %c0_18], %24 {strides = array<i32>} : memref<1x4x4xf32, #tpu.memory_space<vmem>>, vector<1x4x4xf32>,
    return
  }
  func.func @transform_0(%arg0: i32, %arg1: i32) -> (i32, i32, i32) {
    %c0_i32 = arith.constant 0 : i32
    %c0_i32_0 = arith.constant 0 : i32
    return %arg0, %c0_i32, %arg1 : i32, i32, i32
  }
  func.func @transform_1(%arg0: i32, %arg1: i32) -> (i32, i32, i32) {
    %c0_i32 = arith.constant 0 : i32
    %c0_i32_0 = arith.constant 0 : i32
    %c0_i32_1 = arith.constant 0 : i32
    return %arg0, %c0_i32, %c0_i32_0 : i32, i32, i32
  }
  func.func @transform_2(%arg0: i32, %arg1: i32) -> (i32, i32, i32) {
    %c0_i32 = arith.constant 0 : i32
    %c0_i32_0 = arith.constant 0 : i32
    %c0_i32_1 = arith.constant 0 : i32
    return %arg0, %c0_i32, %c0_i32_0 : i32, i32, i32
  }
}

module attributes {stable_mosaic.version = 11 : i64} {
  func.func @_apply_kernel(%arg0: i32, %arg1: i32, %arg2: memref<1x4x256xf32, #tpu.memory_space<vmem>>, %arg3: memref<8x4xf32, #tpu.memory_space<vmem>>, %arg4: memref<8x1xf32, #tpu.memory_space<vmem>>, %arg5: memref<1x8x256xf32, #tpu.memory_space<vmem>>) attributes {dimension_semantics = [#tpu.dimension_semantics<parallel>, #tpu.dimension_semantics<parallel>], iteration_bounds = array<i64: 2, 1>, scalar_prefetch = 0 : i64, scratch_operands = 0 : i64, tpu.core_type = #tpu.core_type<tc>, window_params = [{transform_indices = @transform_0, window_bounds = array<i64: 1, 4, 256>}, {pipeline_mode = #tpu.pipeline_mode<synchronous>, transform_indices = @transform_1, window_bounds = array<i64: 8, 4>}, {pipeline_mode = #tpu.pipeline_mode<synchronous>, transform_indices = @transform_2, window_bounds = array<i64: 8, 1>}, {transform_indices = @transform_3, window_bounds = array<i64: 1, 8, 256>}]} {
    %c0 = arith.constant 0 : index
    %c0_0 = arith.constant 0 : index
    %0 = vector.load %arg3[%c0, %c0_0] : memref<8x4xf32, #tpu.memory_space<vmem>>, vector<8x4xf32>
    %c0_1 = arith.constant 0 : index
    %c0_2 = arith.constant 0 : index
    %1 = vector.load %arg4[%c0_1, %c0_2] : memref<8x1xf32, #tpu.memory_space<vmem>>, vector<8x1xf32>
    %c0_i32 = arith.constant 0 : i32
    %2 = arith.index_cast %c0_i32 : i32 to index
    %c0_3 = arith.constant 0 : index
    %c0_4 = arith.constant 0 : index
    %3 = vector.load %arg2[%2, %c0_3, %c0_4] : memref<1x4x256xf32, #tpu.memory_space<vmem>>, vector<1x4x256xf32>
    %4 = vector.shape_cast %3 : vector<1x4x256xf32> to vector<4x256xf32>
    %cst = arith.constant dense<0.000000e+00> : vector<8x256xf32>
    %5 = tpu.matmul %0, %4, %cst {dimension_numbers = #tpu.dot_dimension_numbers<[1], [0], [0], [1], [0, 0, 1, 1], [], []>} : vector<8x4xf32>, vector<4x256xf32>, vector<8x256xf32> -> vector<8x256xf32>
    %6 = vector.broadcast %1 : vector<8x1xf32> to vector<8x256xf32>
    %7 = arith.addf %5, %6 : vector<8x256xf32>
    %8 = arith.index_cast %c0_i32 : i32 to index
    %c0_5 = arith.constant 0 : index
    %c0_6 = arith.constant 0 : index
    %9 = vector.load %arg5[%8, %c0_5, %c0_6] : memref<1x8x256xf32, #tpu.memory_space<vmem>>, vector<1x8x256xf32>
    %10 = vector.shape_cast %9 : vector<1x8x256xf32> to vector<8x256xf32>
    %11 = vector.shape_cast %7 : vector<8x256xf32> to vector<1x8x256xf32>
    tpu.vector_store %arg5[%8, %c0_5, %c0_6], %11 {strides = array<i32>} : memref<1x8x256xf32, #tpu.memory_space<vmem>>, vector<1x8x256xf32>,
    %c1_i32 = arith.constant 1 : i32
    return
  }
  func.func @transform_0(%arg0: i32, %arg1: i32) -> (i32, i32, i32) {
    %c0_i32 = arith.constant 0 : i32
    %c0_i32_0 = arith.constant 0 : i32
    return %arg0, %c0_i32, %arg1 : i32, i32, i32
  }
  func.func @transform_1(%arg0: i32, %arg1: i32) -> (i32, i32) {
    %c0_i32 = arith.constant 0 : i32
    %c0_i32_0 = arith.constant 0 : i32
    %c0_i32_1 = arith.constant 0 : i32
    return %c0_i32, %c0_i32_0 : i32, i32
  }
  func.func @transform_2(%arg0: i32, %arg1: i32) -> (i32, i32) {
    %c0_i32 = arith.constant 0 : i32
    %c0_i32_0 = arith.constant 0 : i32
    %c0_i32_1 = arith.constant 0 : i32
    return %c0_i32, %c0_i32_0 : i32, i32
  }
  func.func @transform_3(%arg0: i32, %arg1: i32) -> (i32, i32, i32) {
    %c0_i32 = arith.constant 0 : i32
    %c0_i32_0 = arith.constant 0 : i32
    return %arg0, %c0_i32, %arg1 : i32, i32, i32
  }
}

</mosaic_0001>

<llo_original>
// kernel: convp_forward.2
$region0: #{convp_forward.2}
  #allocation0 [shape = 'u32[]', space=smem, size = 0x4, offset = 0x4, fixed_abs, tag = 'smem constant byte address 0x4 - core index']
  #allocation1 [shape = 'u32[72,128]{1,0:T(1,128)}', space=vmem, size = 0x9000, scoped, tag = 'internal scratch']
  %s0 = inlined_call_operand.vmem [shape: f32[2,4,256], index: 0, kind: input, shape index: {}]
  %s1 = inlined_call_operand.vmem [shape: f32[2,4,1], index: 1, kind: output, shape index: {0}]
  %s2 = inlined_call_operand.vmem [shape: f32[2,4,4], index: 2, kind: output, shape index: {1}]
  %3 = xla_tuple %s1, %s2
  %s4 = sld [smem:[#allocation0]]
  $region49: #{convp_forward.2} parent=0
    _
  %s6 = ssub.s32 1, %s4
  %s7 = scalar_select 0, %s6, %s4
  loop: start=0, step=1, limit=4
  $region2: #{convp_forward.2} parent=0 // loop_pre_header
    _
  $region3: #{convp_forward.2} parent=0 // loop_header
    %s9 = sphi 0, %s13
    %p10 = scmp.ge.s32.totalorder %s9, 4
    %s16 = sphi 0, %s28
    %s17 = sphi 0, %s24
    %s18 = sphi 0, %s16
    %s19 = sphi 0, %s17
    %s20 = sphi 0, %s18
    %s21 = sphi 0, %s19
    %s33 = sphi 0, %s35
    %s36 = sphi 0, %s33
    %s37 = sphi 0, %s36
    %s53 = sphi 0, %s37
    %s59 = sphi 0, %s61
    %s62 = sphi 0, %s59
    %s63 = sphi 0, %s62
    %s79 = sphi 0, %s63
    %s85 = sphi 0, %s87
    %s88 = sphi 0, %s85
    %s89 = sphi 0, %s88
    %s105 = sphi 0, %s89
  $region4: #{convp_forward.2} parent=0 // loop_header_branch
    %12 = sbr.rel (%p10) target = $region8
  $region5: #{convp_forward.2} parent=0 // loop_body
    %s14 = ssub.s32 %s9, 1
    %s15 = ssub.s32 %s9, 2
    %s22 = sadd.s32 1, %s17
    %p23 = scmp.ge.s32.totalorder %s22, 1
    %s24 = scalar_select %p23, 0, %s22
    %s25 = sadd.s32 1, %s16
    %s26 = scalar_select %p23, %s25, %s16
    %p27 = scmp.ge.s32.totalorder %s26, 2
    %s28 = scalar_select %p27, 0, %s26
    %s29 = ssub.s32 %s16, %s28
    %s30 = ssub.s32 %s17, %s24
    %s31 = sor.u32 %s29, %s30
    %p32 = scmp.eq.s32.totalorder %s31, 0
    %s34 = sadd.s32 %s33, 1
    %s35 = scalar_select %p32, %s33, %s34
    %p38 = pneg %p32
    %p39 = scmp.eq.s32.totalorder %s9, 1
    %p40 = por %p38, %p39
    %p41 = scmp.ne.s32.totalorder %s33, %s36
    %p42 = scmp.eq.s32.totalorder %s9, 0
    %p43 = por %p41, %p42
    %p44 = scmp.ne.s32.totalorder %s33, %s36
    %p45 = scmp.eq.s32.totalorder %s14, 1
    %p46 = por %p44, %p45
    %p47 = scmp.ne.s32.totalorder %s36, %s37
    %p48 = scmp.eq.s32.totalorder %s14, 0
    %p49 = por %p47, %p48
    %p50 = scmp.ne.s32.totalorder %s36, %s37
    %p51 = scmp.eq.s32.totalorder %s15, 1
    %p52 = por %p50, %p51
    %p54 = scmp.ne.s32.totalorder %s37, %s53
    %p55 = scmp.eq.s32.totalorder %s15, 0
    %p56 = por %p54, %p55
    %s57 = ssub.s32 %s16, %s28
    %p58 = scmp.eq.s32.totalorder %s57, 0
    %s60 = sadd.s32 %s59, 1
    %s61 = scalar_select %p58, %s59, %s60
    %p64 = pneg %p58
    %p65 = scmp.eq.s32.totalorder %s9, 1
    %p66 = por %p64, %p65
    %p67 = scmp.ne.s32.totalorder %s59, %s62
    %p68 = scmp.eq.s32.totalorder %s9, 0
    %p69 = por %p67, %p68
    %p70 = scmp.ne.s32.totalorder %s59, %s62
    %p71 = scmp.eq.s32.totalorder %s14, 1
    %p72 = por %p70, %p71
    %p73 = scmp.ne.s32.totalorder %s62, %s63
    %p74 = scmp.eq.s32.totalorder %s14, 0
    %p75 = por %p73, %p74
    %p76 = scmp.ne.s32.totalorder %s62, %s63
    %p77 = scmp.eq.s32.totalorder %s15, 1
    %p78 = por %p76, %p77
    %p80 = scmp.ne.s32.totalorder %s63, %s79
    %p81 = scmp.eq.s32.totalorder %s15, 0
    %p82 = por %p80, %p81
    %s83 = ssub.s32 %s16, %s28
    %p84 = scmp.eq.s32.totalorder %s83, 0
    %s86 = sadd.s32 %s85, 1
    %s87 = scalar_select %p84, %s85, %s86
    %p90 = pneg %p84
    %p91 = scmp.eq.s32.totalorder %s9, 1
    %p92 = por %p90, %p91
    %p93 = scmp.ne.s32.totalorder %s85, %s88
    %p94 = scmp.eq.s32.totalorder %s9, 0
    %p95 = por %p93, %p94
    %p96 = scmp.ne.s32.totalorder %s85, %s88
    %p97 = scmp.eq.s32.totalorder %s14, 1
    %p98 = por %p96, %p97
    %p99 = scmp.ne.s32.totalorder %s88, %s89
    %p100 = scmp.eq.s32.totalorder %s14, 0
    %p101 = por %p99, %p100
    %p102 = scmp.ne.s32.totalorder %s88, %s89
    %p103 = scmp.eq.s32.totalorder %s15, 1
    %p104 = por %p102, %p103
    %p106 = scmp.ne.s32.totalorder %s89, %s105
    %p107 = scmp.eq.s32.totalorder %s15, 0
    %p108 = por %p106, %p107
    %p109 = scmp.le.s32.totalorder 1, %s9
    %p110 = scmp.lt.s32.totalorder %s9, 3
    %p111 = pnand %p109, %p110
    %p112 = pneg %p111
    // Predicated region
    $region9: #{convp_forward.2} parent=5 // pred_check
      _
    $region10: #{convp_forward.2} parent=5 // pred_check_branch
      %114 = sbr.rel (%p111) target = $region12
    $region11: #{convp_forward.2} parent=5 // pred_region
      %s115 = ssub.s32 %s9, 1
    $region12: #{convp_forward.2} parent=5 // pred_fallthru
      _
    %p116 = scmp.lt.s32.totalorder %s9, 2
    // Predicated region
    $region13: #{convp_forward.2} parent=5 // pred_check
      %p117 = pneg %p116
    $region14: #{convp_forward.2} parent=5 // pred_check_branch
      %119 = sbr.rel (%p117) target = $region16
    $region15: #{convp_forward.2} parent=5 // pred_region
      // Predicated region
      $region17: #{convp_forward.2} parent=15 // pred_check
        %p120 = pneg %p43
      $region18: #{convp_forward.2} parent=15 // pred_check_branch
        %122 = sbr.rel (%p120) target = $region20
      $region19: #{convp_forward.2} parent=15 // pred_region
        %s123 = smul.u32 2, %s17
        %p124 = scmp.lt.s32.totalorder %s16, 1
        %s125 = scalar_select %p124, %s16, 1
        %p126 = scmp.lt.s32.totalorder %s123, 1
        %s127 = scalar_select %p126, %s123, 1
        %s128 = smul.addr %s125, 2
        %s129 = sadd.s32 %s127, %s128
        %s130 = smul.addr %s129, 4
        %s131 = scalar_lea.vmem %s0, %s130
        %s132 = smul.u32 2, %s17
      $region20: #{convp_forward.2} parent=15 // pred_fallthru
        _
    $region16: #{convp_forward.2} parent=5 // pred_fallthru
      _
    %p133 = scmp.le.s32.totalorder 1, %s9
    %p134 = scmp.lt.s32.totalorder %s9, 3
    %p135 = pnand %p133, %p134
    %p136 = pneg %p135
    // Predicated region
    $region21: #{convp_forward.2} parent=5 // pred_check
      _
    $region22: #{convp_forward.2} parent=5 // pred_check_branch
      %138 = sbr.rel (%p135) target = $region24
    $region23: #{convp_forward.2} parent=5 // pred_region
      %s139 = ssub.s32 %s9, 1
      %s140 = smul.u32 2, %s19
      %p141 = scmp.lt.s32.totalorder %s18, 1
      %s142 = scalar_select %p141, %s18, 1
      %p143 = scmp.lt.s32.totalorder %s140, 1
      %s144 = scalar_select %p143, %s140, 1
      %s145 = smul.addr %s142, 2
      %s146 = sadd.s32 %s144, %s145
      %s147 = smul.addr %s146, 4
      %s148 = scalar_lea.vmem %s0, %s147
      %p149 = pneg %p49
      %p150 = pneg %p46
      %p151 = pneg %p75
      %p152 = pneg %p72
      %p153 = scmp.lt.s32.totalorder %s18, 1
      %s154 = scalar_select %p153, %s18, 1
      %s155 = smul.addr %s154, 4
      %s156 = scalar_lea.vmem %s1, %s155
      %p157 = pneg %p101
      %p158 = pneg %p98
      %p159 = scmp.lt.s32.totalorder %s18, 1
      %s160 = scalar_select %p159, %s18, 1
      %s161 = smul.addr %s160, 4
      %s162 = scalar_lea.vmem %s2, %s161
      %s163 = smul.u32 2, %s19
      %p164 = scmp.lt.s32.totalorder %s18, 1
      %s165 = scalar_select %p164, %s18, 1
      %p166 = scmp.lt.s32.totalorder %s163, 1
      %s167 = scalar_select %p166, %s163, 1
      %s168 = smul.addr %s165, 2
      %s169 = sadd.s32 %s167, %s168
      %s170 = smul.addr %s169, 4
      %s171 = scalar_lea.vmem %s0, %s170
      %s172 = smul.u32 2, %s19
      %p173 = scmp.lt.s32.totalorder %s18, 1
      %s174 = scalar_select %p173, %s18, 1
      %s175 = smul.addr %s174, 4
      %s176 = scalar_lea.vmem %s1, %s175
      %p177 = scmp.lt.s32.totalorder %s18, 1
      %s178 = scalar_select %p177, %s18, 1
      %s179 = smul.addr %s178, 4
      %s180 = scalar_lea.vmem %s2, %s179
      %p181 = scmp.eq.s32.totalorder %s19, 0
      // Predicated region
      $region25: #{convp_forward.2} parent=23 // pred_check
        %p182 = pneg %p181
      $region26: #{convp_forward.2} parent=23 // pred_check_branch
        %184 = sbr.rel (%p182) target = $region28
      $region27: #{convp_forward.2} parent=23 // pred_region
        %vm185 = vcmask 3072
        %186 = vst.msk [vmem:[%s176] sm:$0xf] %vm185, 0.0
        %vm187 = vcmask 27648
        %188 = vst.msk [vmem:[%s180] sm:$0xf] %vm187, 0.0
      $region28: #{convp_forward.2} parent=23 // pred_fallthru
        _
      %v189 = vld [vmem:[%s171] sm:$0xff]
      %191 = vst [vmem:[#allocation1] ss:$2 sm:$0xff] %v189
      %v192 = vld.sshfl [vmem:[#allocation1] sm:$0xff pattern:$0x75316420]
      %v193 = vld.sshfl [vmem:[#allocation1 + $0x8] sm:$0xff pattern:$0x75316420]
      %196 = vmatpush.msra.mxu0 1.0
      %197 = vmatpush.msra.mxu0 1.0
      %198 = vmatpush.msra.mxu0 1.0
      %199 = vmatpush.msra.mxu0 1.0
      %200 = vmatpush.msra.mxu0 1.0
      %201 = vmatpush.msra.mxu0 1.0
      %202 = vmatpush.msra.mxu0 1.0
      %203 = vmatpush.msra.mxu0 1.0
      %204 = vmatpush.msra.mxu0 1.0
      %205 = vmatpush.msra.mxu0 1.0
      %206 = vmatpush.msra.mxu0 1.0
      %207 = vmatpush.msra.mxu0 1.0
      %208 = vmatpush.msra.mxu0 1.0
      %209 = vmatpush.msra.mxu0 1.0
      %210 = vmatpush.msra.mxu0 1.0
      %211 = vmatpush.msra.mxu0 1.0
      %212 = vmatmul.f32.gmra.mxu0 %v192
      %v213 = vpop.f32.mrf.mxu0
      %v214 = vadd.f32 0.0, %v213
      %215 = vdwg.mxu0
      %216 = vmatpush.msra.mxu0 1.0
      %217 = vmatpush.msra.mxu0 1.0
      %218 = vmatpush.msra.mxu0 1.0
      %219 = vmatpush.msra.mxu0 1.0
      %220 = vmatpush.msra.mxu0 1.0
      %221 = vmatpush.msra.mxu0 1.0
      %222 = vmatpush.msra.mxu0 1.0
      %223 = vmatpush.msra.mxu0 1.0
      %224 = vmatpush.msra.mxu0 1.0
      %225 = vmatpush.msra.mxu0 1.0
      %226 = vmatpush.msra.mxu0 1.0
      %227 = vmatpush.msra.mxu0 1.0
      %228 = vmatpush.msra.mxu0 1.0
      %229 = vmatpush.msra.mxu0 1.0
      %230 = vmatpush.msra.mxu0 1.0
      %231 = vmatpush.msra.mxu0 1.0
      %232 = vmatmul.f32.gmra.mxu0 %v193
      %v233 = vpop.f32.mrf.mxu0
      %v234 = vadd.f32 %v214, %v233
      %235 = vdwg.mxu0
      %236 = vst [vmem:[#allocation1] ss:$2 sm:$0xff] %v189
      %v237 = vld.sshfl [vmem:[#allocation1] sm:$0xff pattern:$0x75316420]
      %v238 = vld.sshfl [vmem:[#allocation1 + $0x8] sm:$0xff pattern:$0x75316420]
      %241 = vst [vmem:[#allocation1] ss:$2 sm:$0xff] %v189
      %v242 = vld.sshfl [vmem:[#allocation1] sm:$0xff pattern:$0x75316420]
      %v243 = vld.sshfl [vmem:[#allocation1 + $0x8] sm:$0xff pattern:$0x75316420]
      %246 = vmatpush.xpose.msra.mxu0 0.0
      %247 = vmatpush.xpose.msra.mxu0 0.0
      %248 = vmatpush.xpose.msra.mxu0 0.0
      %249 = vmatpush.xpose.msra.mxu0 0.0
      %250 = vmatpush.xpose.msra.mxu0 0.0
      %251 = vmatpush.xpose.msra.mxu0 0.0
      %252 = vmatpush.xpose.msra.mxu0 0.0
      %253 = vmatpush.xpose.msra.mxu0 0.0
      %254 = vmatpush.xpose.msra.mxu0 0.0
      %255 = vmatpush.xpose.msra.mxu0 0.0
      %256 = vmatpush.xpose.msra.mxu0 0.0
      %257 = vmatpush.xpose.msra.mxu0 0.0
      %258 = vmatpush.xpose.msra.mxu0 0.0
      %259 = vmatpush.xpose.msra.mxu0 0.0
      %260 = vmatpush.xpose.msra.mxu0 0.0
      %261 = vmatpush.xpose.msra.mxu0 %v242
      %262 = vmatmul.f32.gmra.mxu0 %v237
      %v263 = vpop.f32.mrf.mxu0
      %v264 = vadd.f32 0.0, %v263
      %265 = vdwg.mxu0
      %266 = vmatpush.xpose.msra.mxu0 0.0
      %267 = vmatpush.xpose.msra.mxu0 0.0
      %268 = vmatpush.xpose.msra.mxu0 0.0
      %269 = vmatpush.xpose.msra.mxu0 0.0
      %270 = vmatpush.xpose.msra.mxu0 0.0
      %271 = vmatpush.xpose.msra.mxu0 0.0
      %272 = vmatpush.xpose.msra.mxu0 0.0
      %273 = vmatpush.xpose.msra.mxu0 0.0
      %274 = vmatpush.xpose.msra.mxu0 0.0
      %275 = vmatpush.xpose.msra.mxu0 0.0
      %276 = vmatpush.xpose.msra.mxu0 0.0
      %277 = vmatpush.xpose.msra.mxu0 0.0
      %278 = vmatpush.xpose.msra.mxu0 0.0
      %279 = vmatpush.xpose.msra.mxu0 0.0
      %280 = vmatpush.xpose.msra.mxu0 0.0
      %281 = vmatpush.xpose.msra.mxu0 %v243
      %282 = vmatmul.f32.gmra.mxu0 %v238
      %v283 = vpop.f32.mrf.mxu0
      %v284 = vadd.f32 %v264, %v283
      %285 = vdwg.mxu0
      %v286 = vld [vmem:[%s176] sm:$0xf]
      %v287 = vadd.f32 %v286, %v234
      %vm288 = vcmask 3072
      %289 = vst.msk [vmem:[%s176] sm:$0xf] %vm288, %v287
      %v290 = vld [vmem:[%s180] sm:$0xf]
      %v291 = vadd.f32 %v290, %v284
      %vm292 = vcmask 27648
      %293 = vst.msk [vmem:[%s180] sm:$0xf] %vm292, %v291
      %p294 = scmp.lt.s32.totalorder %s18, 1
      %s295 = scalar_select %p294, %s18, 1
      %s296 = smul.addr %s295, 4
      %s297 = scalar_lea.vmem %s1, %s296
      %p298 = scmp.lt.s32.totalorder %s18, 1
      %s299 = scalar_select %p298, %s18, 1
      %s300 = smul.addr %s299, 4
      %s301 = scalar_lea.vmem %s2, %s300
      // Predicated region
      $region29: #{convp_forward.2} parent=23 // pred_check
        %p302 = pneg %p72
      $region30: #{convp_forward.2} parent=23 // pred_check_branch
        %304 = sbr.rel (%p302) target = $region32
      $region31: #{convp_forward.2} parent=23 // pred_region
        _
      $region32: #{convp_forward.2} parent=23 // pred_fallthru
        _
      // Predicated region
      $region33: #{convp_forward.2} parent=23 // pred_check
        %p305 = pneg %p98
      $region34: #{convp_forward.2} parent=23 // pred_check_branch
        %307 = sbr.rel (%p305) target = $region36
      $region35: #{convp_forward.2} parent=23 // pred_region
        _
      $region36: #{convp_forward.2} parent=23 // pred_fallthru
        _
    $region24: #{convp_forward.2} parent=5 // pred_fallthru
      _
    %p308 = scmp.le.s32.totalorder 2, %s9
    // Predicated region
    $region37: #{convp_forward.2} parent=5 // pred_check
      %p309 = pneg %p308
    $region38: #{convp_forward.2} parent=5 // pred_check_branch
      %311 = sbr.rel (%p309) target = $region40
    $region39: #{convp_forward.2} parent=5 // pred_region
      %s312 = ssub.s32 %s9, 2
      // Predicated region
      $region41: #{convp_forward.2} parent=39 // pred_check
        %p313 = pneg %p78
      $region42: #{convp_forward.2} parent=39 // pred_check_branch
        %315 = sbr.rel (%p313) target = $region44
      $region43: #{convp_forward.2} parent=39 // pred_region
        %p316 = scmp.lt.s32.totalorder %s20, 1
        %s317 = scalar_select %p316, %s20, 1
        %s318 = smul.addr %s317, 4
        %s319 = scalar_lea.vmem %s1, %s318
      $region44: #{convp_forward.2} parent=39 // pred_fallthru
        _
      // Predicated region
      $region45: #{convp_forward.2} parent=39 // pred_check
        %p320 = pneg %p104
      $region46: #{convp_forward.2} parent=39 // pred_check_branch
        %322 = sbr.rel (%p320) target = $region48
      $region47: #{convp_forward.2} parent=39 // pred_region
        %p323 = scmp.lt.s32.totalorder %s20, 1
        %s324 = scalar_select %p323, %s20, 1
        %s325 = smul.addr %s324, 4
        %s326 = scalar_lea.vmem %s2, %s325
      $region48: #{convp_forward.2} parent=39 // pred_fallthru
        _
    $region40: #{convp_forward.2} parent=5 // pred_fallthru
      _
  $region6: #{convp_forward.2} parent=0 // loop_footer
    %s13 = sadd.s32 1, %s9
  $region7: #{convp_forward.2} parent=0 // loop_footer_branch
    %8 = sbr.rel target = $region3
  $region8: #{convp_forward.2} parent=0 // loop_exit
    _

// kernel: convp_forward.3
$region0: #{convp_forward.3}
  #allocation0 [shape = 'u32[]', space=smem, size = 0x4, offset = 0x4, fixed_abs, tag = 'smem constant byte address 0x4 - core index']
  #allocation1 [shape = 'u32[72,128]{1,0:T(1,128)}', space=vmem, size = 0x9000, scoped, tag = 'internal scratch']
  %s0 = inlined_call_operand.vmem [shape: f32[2,4,256], index: 0, kind: input, shape index: {}]
  %s1 = inlined_call_operand.vmem [shape: f32[8,4], index: 1, kind: input, shape index: {}]
  %s2 = inlined_call_operand.vmem [shape: f32[8,1], index: 2, kind: input, shape index: {}]
  %s3 = inlined_call_operand.vmem [shape: f32[2,8,256], index: 3, kind: output, shape index: {}]
  %s4 = sld [smem:[#allocation0]]
  $region45: #{convp_forward.3} parent=0
    _
  %s6 = ssub.s32 1, %s4
  %s7 = scalar_select 0, %s6, %s4
  loop: start=0, step=1, limit=4
  $region2: #{convp_forward.3} parent=0 // loop_pre_header
    _
  $region3: #{convp_forward.3} parent=0 // loop_header
    %s9 = sphi 0, %s13
    %p10 = scmp.ge.s32.totalorder %s9, 4
    %s16 = sphi 0, %s28
    %s17 = sphi 0, %s24
    %s18 = sphi 0, %s16
    %s19 = sphi 0, %s17
    %s20 = sphi 0, %s18
    %s21 = sphi 0, %s19
    %s33 = sphi 0, %s35
    %s36 = sphi 0, %s33
    %s37 = sphi 0, %s36
    %s53 = sphi 0, %s37
    %s57 = sphi 0, %s57
    %s59 = sphi 0, %s57
    %s60 = sphi 0, %s59
    %s74 = sphi 0, %s60
    %s78 = sphi 0, %s78
    %s80 = sphi 0, %s78
    %s81 = sphi 0, %s80
    %s95 = sphi 0, %s81
    %s103 = sphi 0, %s105
    %s106 = sphi 0, %s103
    %s107 = sphi 0, %s106
    %s123 = sphi 0, %s107
  $region4: #{convp_forward.3} parent=0 // loop_header_branch
    %12 = sbr.rel (%p10) target = $region8
  $region5: #{convp_forward.3} parent=0 // loop_body
    %s14 = ssub.s32 %s9, 1
    %s15 = ssub.s32 %s9, 2
    %s22 = sadd.s32 1, %s17
    %p23 = scmp.ge.s32.totalorder %s22, 1
    %s24 = scalar_select %p23, 0, %s22
    %s25 = sadd.s32 1, %s16
    %s26 = scalar_select %p23, %s25, %s16
    %p27 = scmp.ge.s32.totalorder %s26, 2
    %s28 = scalar_select %p27, 0, %s26
    %s29 = ssub.s32 %s16, %s28
    %s30 = ssub.s32 %s17, %s24
    %s31 = sor.u32 %s29, %s30
    %p32 = scmp.eq.s32.totalorder %s31, 0
    %s34 = sadd.s32 %s33, 1
    %s35 = scalar_select %p32, %s33, %s34
    %p38 = pneg %p32
    %p39 = scmp.eq.s32.totalorder %s9, 1
    %p40 = por %p38, %p39
    %p41 = scmp.ne.s32.totalorder %s33, %s36
    %p42 = scmp.eq.s32.totalorder %s9, 0
    %p43 = por %p41, %p42
    %p44 = scmp.ne.s32.totalorder %s33, %s36
    %p45 = scmp.eq.s32.totalorder %s14, 1
    %p46 = por %p44, %p45
    %p47 = scmp.ne.s32.totalorder %s36, %s37
    %p48 = scmp.eq.s32.totalorder %s14, 0
    %p49 = por %p47, %p48
    %p50 = scmp.ne.s32.totalorder %s36, %s37
    %p51 = scmp.eq.s32.totalorder %s15, 1
    %p52 = por %p50, %p51
    %p54 = scmp.ne.s32.totalorder %s37, %s53
    %p55 = scmp.eq.s32.totalorder %s15, 0
    %p56 = por %p54, %p55
    %s58 = sadd.s32 %s57, 1
    %p61 = scmp.eq.s32.totalorder %s9, 1
    %p62 = scmp.ne.s32.totalorder %s57, %s59
    %p63 = scmp.eq.s32.totalorder %s9, 0
    %p64 = por %p62, %p63
    %p65 = scmp.ne.s32.totalorder %s57, %s59
    %p66 = scmp.eq.s32.totalorder %s14, 1
    %p67 = por %p65, %p66
    %p68 = scmp.ne.s32.totalorder %s59, %s60
    %p69 = scmp.eq.s32.totalorder %s14, 0
    %p70 = por %p68, %p69
    %p71 = scmp.ne.s32.totalorder %s59, %s60
    %p72 = scmp.eq.s32.totalorder %s15, 1
    %p73 = por %p71, %p72
    %p75 = scmp.ne.s32.totalorder %s60, %s74
    %p76 = scmp.eq.s32.totalorder %s15, 0
    %p77 = por %p75, %p76
    %s79 = sadd.s32 %s78, 1
    %p82 = scmp.eq.s32.totalorder %s9, 1
    %p83 = scmp.ne.s32.totalorder %s78, %s80
    %p84 = scmp.eq.s32.totalorder %s9, 0
    %p85 = por %p83, %p84
    %p86 = scmp.ne.s32.totalorder %s78, %s80
    %p87 = scmp.eq.s32.totalorder %s14, 1
    %p88 = por %p86, %p87
    %p89 = scmp.ne.s32.totalorder %s80, %s81
    %p90 = scmp.eq.s32.totalorder %s14, 0
    %p91 = por %p89, %p90
    %p92 = scmp.ne.s32.totalorder %s80, %s81
    %p93 = scmp.eq.s32.totalorder %s15, 1
    %p94 = por %p92, %p93
    %p96 = scmp.ne.s32.totalorder %s81, %s95
    %p97 = scmp.eq.s32.totalorder %s15, 0
    %p98 = por %p96, %p97
    %s99 = ssub.s32 %s16, %s28
    %s100 = ssub.s32 %s17, %s24
    %s101 = sor.u32 %s99, %s100
    %p102 = scmp.eq.s32.totalorder %s101, 0
    %s104 = sadd.s32 %s103, 1
    %s105 = scalar_select %p102, %s103, %s104
    %p108 = pneg %p102
    %p109 = scmp.eq.s32.totalorder %s9, 1
    %p110 = por %p108, %p109
    %p111 = scmp.ne.s32.totalorder %s103, %s106
    %p112 = scmp.eq.s32.totalorder %s9, 0
    %p113 = por %p111, %p112
    %p114 = scmp.ne.s32.totalorder %s103, %s106
    %p115 = scmp.eq.s32.totalorder %s14, 1
    %p116 = por %p114, %p115
    %p117 = scmp.ne.s32.totalorder %s106, %s107
    %p118 = scmp.eq.s32.totalorder %s14, 0
    %p119 = por %p117, %p118
    %p120 = scmp.ne.s32.totalorder %s106, %s107
    %p121 = scmp.eq.s32.totalorder %s15, 1
    %p122 = por %p120, %p121
    %p124 = scmp.ne.s32.totalorder %s107, %s123
    %p125 = scmp.eq.s32.totalorder %s15, 0
    %p126 = por %p124, %p125
    %p127 = scmp.le.s32.totalorder 1, %s9
    %p128 = scmp.lt.s32.totalorder %s9, 3
    %p129 = pnand %p127, %p128
    %p130 = pneg %p129
    // Predicated region
    $region9: #{convp_forward.3} parent=5 // pred_check
      _
    $region10: #{convp_forward.3} parent=5 // pred_check_branch
      %132 = sbr.rel (%p129) target = $region12
    $region11: #{convp_forward.3} parent=5 // pred_region
      %s133 = ssub.s32 %s9, 1
      // Predicated region
      $region13: #{convp_forward.3} parent=11 // pred_check
        %p134 = pneg %p70
      $region14: #{convp_forward.3} parent=11 // pred_check_branch
        %136 = sbr.rel (%p134) target = $region16
      $region15: #{convp_forward.3} parent=11 // pred_region
        _
      $region16: #{convp_forward.3} parent=11 // pred_fallthru
        _
      // Predicated region
      $region17: #{convp_forward.3} parent=11 // pred_check
        %p137 = pneg %p91
      $region18: #{convp_forward.3} parent=11 // pred_check_branch
        %139 = sbr.rel (%p137) target = $region20
      $region19: #{convp_forward.3} parent=11 // pred_region
        _
      $region20: #{convp_forward.3} parent=11 // pred_fallthru
        _
    $region12: #{convp_forward.3} parent=5 // pred_fallthru
      _
    %p140 = scmp.lt.s32.totalorder %s9, 2
    // Predicated region
    $region21: #{convp_forward.3} parent=5 // pred_check
      %p141 = pneg %p140
    $region22: #{convp_forward.3} parent=5 // pred_check_branch
      %143 = sbr.rel (%p141) target = $region24
    $region23: #{convp_forward.3} parent=5 // pred_region
      // Predicated region
      $region25: #{convp_forward.3} parent=23 // pred_check
        %p144 = pneg %p43
      $region26: #{convp_forward.3} parent=23 // pred_check_branch
        %146 = sbr.rel (%p144) target = $region28
      $region27: #{convp_forward.3} parent=23 // pred_region
        %s147 = smul.u32 2, %s17
        %p148 = scmp.lt.s32.totalorder %s16, 1
        %s149 = scalar_select %p148, %s16, 1
        %p150 = scmp.lt.s32.totalorder %s147, 1
        %s151 = scalar_select %p150, %s147, 1
        %s152 = smul.addr %s149, 2
        %s153 = sadd.s32 %s151, %s152
        %s154 = smul.addr %s153, 4
        %s155 = scalar_lea.vmem %s0, %s154
        %s156 = smul.u32 2, %s17
      $region28: #{convp_forward.3} parent=23 // pred_fallthru
        _
    $region24: #{convp_forward.3} parent=5 // pred_fallthru
      _
    %p157 = scmp.le.s32.totalorder 1, %s9
    %p158 = scmp.lt.s32.totalorder %s9, 3
    %p159 = pnand %p157, %p158
    %p160 = pneg %p159
    // Predicated region
    $region29: #{convp_forward.3} parent=5 // pred_check
      _
    $region30: #{convp_forward.3} parent=5 // pred_check_branch
      %162 = sbr.rel (%p159) target = $region32
    $region31: #{convp_forward.3} parent=5 // pred_region
      %s163 = ssub.s32 %s9, 1
      %s164 = smul.u32 2, %s19
      %p165 = scmp.lt.s32.totalorder %s18, 1
      %s166 = scalar_select %p165, %s18, 1
      %p167 = scmp.lt.s32.totalorder %s164, 1
      %s168 = scalar_select %p167, %s164, 1
      %s169 = smul.addr %s166, 2
      %s170 = sadd.s32 %s168, %s169
      %s171 = smul.addr %s170, 4
      %s172 = scalar_lea.vmem %s0, %s171
      %p173 = pneg %p49
      %p174 = pneg %p46
      %p175 = pneg %p70
      %p176 = pneg %p67
      %p177 = pneg %p91
      %p178 = pneg %p88
      %p179 = pneg %p119
      %p180 = pneg %p116
      %s181 = smul.u32 2, %s19
      %p182 = scmp.lt.s32.totalorder %s18, 1
      %s183 = scalar_select %p182, %s18, 1
      %p184 = scmp.lt.s32.totalorder %s181, 1
      %s185 = scalar_select %p184, %s181, 1
      %s186 = smul.addr %s183, 2
      %s187 = sadd.s32 %s185, %s186
      %s188 = smul.addr %s187, 8
      %s189 = scalar_lea.vmem %s3, %s188
      %s190 = smul.u32 2, %s19
      %p191 = scmp.lt.s32.totalorder %s18, 1
      %s192 = scalar_select %p191, %s18, 1
      %p193 = scmp.lt.s32.totalorder %s190, 1
      %s194 = scalar_select %p193, %s190, 1
      %s195 = smul.addr %s192, 2
      %s196 = sadd.s32 %s194, %s195
      %s197 = smul.addr %s196, 4
      %s198 = scalar_lea.vmem %s0, %s197
      %s199 = smul.u32 2, %s19
      %s200 = smul.u32 2, %s19
      %p201 = scmp.lt.s32.totalorder %s18, 1
      %s202 = scalar_select %p201, %s18, 1
      %p203 = scmp.lt.s32.totalorder %s200, 1
      %s204 = scalar_select %p203, %s200, 1
      %s205 = smul.addr %s202, 2
      %s206 = sadd.s32 %s204, %s205
      %s207 = smul.addr %s206, 8
      %s208 = scalar_lea.vmem %s3, %s207
      %s209 = smul.u32 2, %s19
      %v210 = vld [vmem:[%s1] sm:$0xff]
      %v211 = vld [vmem:[%s2] sm:$0xff]
      %v212 = vld [vmem:[%s198] sm:$0xff]
      %214 = vset.pattern.permute.xlu0 0
      %215 = vperm.xlu0 %214, %v211
      %v216 = vpop.permute.xlu0 %215
      %219 = vst [vmem:[#allocation1] ss:$2 sm:$0xff] %v212
      %v220 = vld.sshfl [vmem:[#allocation1] sm:$0xff pattern:$0x75316420]
      %v221 = vld.sshfl [vmem:[#allocation1 + $0x8] sm:$0xff pattern:$0x75316420]
      %vm222 = vcmask 31744
      %v224 = vsel %vm222, %v210, 0
      %vm226 = vcmask 1043456
      %v227 = vsel %vm226, %v220, 0
      %v229 = vsel %vm226, %v221, 0
      %231 = vmatpush.msra.mxu0 0.0
      %232 = vmatpush.msra.mxu0 0.0
      %233 = vmatpush.msra.mxu0 0.0
      %234 = vmatpush.msra.mxu0 0.0
      %235 = vmatpush.msra.mxu0 0.0
      %236 = vmatpush.msra.mxu0 0.0
      %237 = vmatpush.msra.mxu0 0.0
      %238 = vmatpush.msra.mxu0 0.0
      %239 = vmatpush.msra.mxu0 0.0
      %240 = vmatpush.msra.mxu0 0.0
      %241 = vmatpush.msra.mxu0 0.0
      %242 = vmatpush.msra.mxu0 0.0
      %243 = vmatpush.msra.mxu0 0.0
      %244 = vmatpush.msra.mxu0 0.0
      %245 = vmatpush.msra.mxu0 0.0
      %246 = vmatpush.msra.mxu0 %v227
      %247 = vmatmul.f32.gmra.mxu0 %v224
      %v248 = vpop.f32.mrf.mxu0
      %v249 = vadd.f32 %v216, %v248
      %250 = vdwg.mxu0
      %251 = vmatpush.msra.mxu0 0.0
      %252 = vmatpush.msra.mxu0 0.0
      %253 = vmatpush.msra.mxu0 0.0
      %254 = vmatpush.msra.mxu0 0.0
      %255 = vmatpush.msra.mxu0 0.0
      %256 = vmatpush.msra.mxu0 0.0
      %257 = vmatpush.msra.mxu0 0.0
      %258 = vmatpush.msra.mxu0 0.0
      %259 = vmatpush.msra.mxu0 0.0
      %260 = vmatpush.msra.mxu0 0.0
      %261 = vmatpush.msra.mxu0 0.0
      %262 = vmatpush.msra.mxu0 0.0
      %263 = vmatpush.msra.mxu0 0.0
      %264 = vmatpush.msra.mxu0 0.0
      %265 = vmatpush.msra.mxu0 0.0
      %266 = vmatpush.msra.mxu0 %v229
      %267 = vmatmul.f32.gmra.mxu0 %v224
      %v268 = vpop.f32.mrf.mxu0
      %v269 = vadd.f32 %v216, %v268
      %270 = vdwg.mxu0
      %271 = vst [vmem:[%s208] sm:$0xff] %v249
      %272 = vst [vmem:[%s208 + $0x8] sm:$0xff] %v269
      %s273 = smul.u32 2, %s19
      %p274 = scmp.lt.s32.totalorder %s18, 1
      %s275 = scalar_select %p274, %s18, 1
      %p276 = scmp.lt.s32.totalorder %s273, 1
      %s277 = scalar_select %p276, %s273, 1
      %s278 = smul.addr %s275, 2
      %s279 = sadd.s32 %s277, %s278
      %s280 = smul.addr %s279, 8
      %s281 = scalar_lea.vmem %s3, %s280
      // Predicated region
      $region33: #{convp_forward.3} parent=31 // pred_check
        %p282 = pneg %p116
      $region34: #{convp_forward.3} parent=31 // pred_check_branch
        %284 = sbr.rel (%p282) target = $region36
      $region35: #{convp_forward.3} parent=31 // pred_region
        %s285 = smul.u32 2, %s19
      $region36: #{convp_forward.3} parent=31 // pred_fallthru
        _
    $region32: #{convp_forward.3} parent=5 // pred_fallthru
      _
    %p286 = scmp.le.s32.totalorder 2, %s9
    // Predicated region
    $region37: #{convp_forward.3} parent=5 // pred_check
      %p287 = pneg %p286
    $region38: #{convp_forward.3} parent=5 // pred_check_branch
      %289 = sbr.rel (%p287) target = $region40
    $region39: #{convp_forward.3} parent=5 // pred_region
      %s290 = ssub.s32 %s9, 2
      // Predicated region
      $region41: #{convp_forward.3} parent=39 // pred_check
        %p291 = pneg %p122
      $region42: #{convp_forward.3} parent=39 // pred_check_branch
        %293 = sbr.rel (%p291) target = $region44
      $region43: #{convp_forward.3} parent=39 // pred_region
        %s294 = smul.u32 2, %s21
        %p295 = scmp.lt.s32.totalorder %s20, 1
        %s296 = scalar_select %p295, %s20, 1
        %p297 = scmp.lt.s32.totalorder %s294, 1
        %s298 = scalar_select %p297, %s294, 1
        %s299 = smul.addr %s296, 2
        %s300 = sadd.s32 %s298, %s299
        %s301 = smul.addr %s300, 8
        %s302 = scalar_lea.vmem %s3, %s301
      $region44: #{convp_forward.3} parent=39 // pred_fallthru
        _
    $region40: #{convp_forward.3} parent=5 // pred_fallthru
      _
  $region6: #{convp_forward.3} parent=0 // loop_footer
    %s13 = sadd.s32 1, %s9
  $region7: #{convp_forward.3} parent=0 // loop_footer_branch
    %8 = sbr.rel target = $region3
  $region8: #{convp_forward.3} parent=0 // loop_exit
    _

</llo_original>
